<compile_context>
chip_gen: v7x
topology: tpu7x:2x2x1
jax: 0.10.0
libtpu: 0.0.40
codegen_flags: <defaults>
</compile_context>

<pallas_src>
import functools

import jax
import jax.numpy as jnp
from jax.experimental import pallas as pl
from jax.experimental.pallas import tpu as pltpu

_MIB = 1024 * 1024


# --------------------------- budget / tile helpers ---------------------------

@functools.lru_cache(maxsize=None)
def _vmem_budget_bytes():
    """Generation-aware VMEM budget: ~75% of physical, capped at 100 MiB."""
    try:
        cap = int(pltpu.get_tpu_info().vmem_capacity_bytes)
    except Exception:
        cap = 64 * _MIB  # conservative (v7x-sized) fallback
    return max(32 * _MIB, min((cap * 3) // 4, 100 * _MIB))


def _largest_divisor_tile(length, cap, step=8):
    """Largest multiple-of-`step` divisor of `length` that is <= cap (or length)."""
    if length <= cap:
        return length
    cand = (cap // step) * step
    while cand >= step:
        if length % cand == 0:
            return cand
        cand -= step
    return length  # no clean divisor: fall back to the whole axis


def _choose_linear_tiles(M, K, eouts, x_itemsize, w_itemsize, o_itemsize, budget,
                         extra_row_bytes=0):
    """(tm, tk) for the fused row-tiled linears, sized to the VMEM budget."""

    def fits(tm_, tk_):
        per_step = 2 * tm_ * extra_row_bytes  # e.g. double-buffered residual rows
        for eo in eouts:
            blocks = (tm_ * tk_ * x_itemsize + tk_ * eo * w_itemsize
                      + eo * w_itemsize + tm_ * eo * o_itemsize)
            per_step += 2 * blocks        # double-buffered pipeline
            per_step += tm_ * eo * 4      # f32 accumulator scratch
        return per_step <= (budget * 3) // 4

    cands = [K] if K <= 1024 else []
    cands += [c for c in (512, 256, 128) if c < K and K % c == 0]
    if not cands:
        cands = [K]
    tm_caps = (512, 256, 128) if budget >= 64 * _MIB else (256, 128)
    tm, tk = M if M <= tm_caps[0] else tm_caps[0], cands[-1]
    for tm_cap in tm_caps:
        tm = M if M <= tm_cap else tm_cap
        for tk in cands:
            if fits(tm, tk):
                return tm, tk
    return tm, tk  # best effort


def _choose_attn_tiles(Lq, Lk, E, num_heads, itemsize, budget):
    """(tq, tkv) for the flash-style attention, sized to the VMEM budget."""

    def footprint(tq_, tkv_):
        io = 2 * (2 * tq_ * E + 2 * tkv_ * E) * itemsize     # q,o + k,v (dbl-buf)
        scratch = tq_ * E * 4 + 2 * num_heads * max(tq_, 8) * 128 * 4
        return io + scratch

    tq, tkv = Lq, Lk
    for tq_cap, tkv_cap in ((256, 512), (256, 256), (128, 256), (128, 128),
                            (64, 128), (32, 64), (16, 32), (8, 8)):
        tq = _largest_divisor_tile(Lq, tq_cap)
        tkv = _largest_divisor_tile(Lk, tkv_cap)
        if footprint(tq, tkv) <= (budget * 7) // 10:
            return tq, tkv
    return tq, tkv


# ----------------------------- Pallas kernels --------------------------------

def _multi_linear_kernel(*refs, n, scales):
    """n independent y_i = (x_i @ W_i + b_i) * scale_i sharing one grid.

    refs = [x0,w0,b0, ..., o0..o_{n-1}, acc0..acc_{n-1}]; grid=(M_tiles, K_tiles).
    Accumulator is initialized with the broadcast bias at k==0 and only scaled
    and cast at k==nk-1 (no separate zero store / bias add).
    """
    k = pl.program_id(1)
    nk = pl.num_programs(1)
    ins = refs[:3 * n]
    outs = refs[3 * n:4 * n]
    accs = refs[4 * n:]
    for i in range(n):
        x_ref, w_ref, b_ref = ins[3 * i], ins[3 * i + 1], ins[3 * i + 2]
        o_ref, acc_ref, scale = outs[i], accs[i], scales[i]

        @pl.when(k == 0)
        def _init(acc_ref=acc_ref, b_ref=b_ref):
            acc_ref[...] = jnp.broadcast_to(
                b_ref[...].astype(jnp.float32), acc_ref.shape)

        acc_ref[...] += jnp.dot(x_ref[...], w_ref[...],
                                preferred_element_type=jnp.float32)

        @pl.when(k == nk - 1)
        def _store(acc_ref=acc_ref, o_ref=o_ref, scale=scale):
            r = acc_ref[...]
            if scale != 1.0:          # static per-stream scale (trace time)
                r = r * scale
            o_ref[...] = r.astype(o_ref.dtype)


def _flash_attention_kernel(q_ref, k_ref, v_ref, o_ref, m_sc, l_sc, acc_sc, *,
                            num_heads):
    """Online-softmax attention; all heads of one (q-tile, kv-tile) per step.

    Blocks are (1, tq, E) / (1, tkv, E); heads are static lane slices of E.
    grid = (N, Lq_tiles, Lk_tiles); the kv axis is the innermost ("arbitrary").
    """
    ki = pl.program_id(2)
    nk = pl.num_programs(2)

    @pl.when(ki == 0)
    def _init():
        m_sc[...] = jnp.full(m_sc.shape, -jnp.inf, dtype=m_sc.dtype)
        l_sc[...] = jnp.zeros(l_sc.shape, dtype=l_sc.dtype)
        acc_sc[...] = jnp.zeros(acc_sc.shape, dtype=acc_sc.dtype)

    q = q_ref[0]                      # (tq, E)  (1/sqrt(D) already folded in)
    k = k_ref[0]                      # (tkv, E)
    v = v_ref[0]                      # (tkv, E)
    E = q.shape[-1]
    D = E // num_heads

    for h in range(num_heads):        # static unroll; lane slices, no transposes
        lo = h * D
        qh = q[:, lo:lo + D]
        kh = k[:, lo:lo + D]
        vh = v[:, lo:lo + D]
        # QK^T contracting the last dim of both operands (no explicit k.T).
        # NOTE: contraction width is D -> MXU under-occupied when D < 128.
        s = jax.lax.dot_general(qh, kh,
                                dimension_numbers=(((1,), (1,)), ((), ())),
                                preferred_element_type=jnp.float32)   # (tq, tkv)
        m_prev = m_sc[h]                                              # (tq, 1)
        m_new = jnp.maximum(m_prev, jnp.max(s, axis=-1, keepdims=True))
        alpha = jnp.exp(m_prev - m_new)
        p = jnp.exp(s - m_new)
        l_sc[h] = alpha * l_sc[h] + jnp.sum(p, axis=-1, keepdims=True)
        # p cast to v's dtype keeps bf16 inputs on the bf16 MXU path.
        pv = jax.lax.dot_general(p.astype(vh.dtype), vh,
                                 dimension_numbers=(((1,), (0,)), ((), ())),
                                 preferred_element_type=jnp.float32)  # (tq, D)
        acc_sc[:, lo:lo + D] = alpha * acc_sc[:, lo:lo + D] + pv
        m_sc[h] = m_new

    @pl.when(ki == nk - 1)
    def _finalize():
        # Per-head exact normalization into scratch, then ONE lane-dense store.
        for h in range(num_heads):
            lo = h * D
            acc_sc[:, lo:lo + D] = acc_sc[:, lo:lo + D] * pl.reciprocal(
                l_sc[h], approx=False)
        o_ref[0] = acc_sc[...].astype(o_ref.dtype)


def _out_proj_ln_kernel(x_ref, w_ref, b_ref, res_ref, g_ref, beta_ref,
                        o_ref, acc_ref, *, eps):
    """y = LayerNorm(x @ W + b + residual) * gamma + beta; grid=(M_tiles, K_tiles)."""
    k = pl.program_id(1)
    nk = pl.num_programs(1)

    @pl.when(k == 0)
    def _init():
        acc_ref[...] = jnp.broadcast_to(
            b_ref[...].astype(jnp.float32), acc_ref.shape)

    acc_ref[...] += jnp.dot(x_ref[...], w_ref[...],
                            preferred_element_type=jnp.float32)

    @pl.when(k == nk - 1)
    def _finalize():
        y = acc_ref[...] + res_ref[...].astype(jnp.float32)
        mean = jnp.mean(y, axis=-1, keepdims=True)
        var = jnp.mean((y - mean) ** 2, axis=-1, keepdims=True)
        yn = (y - mean) * jax.lax.rsqrt(var + eps)
        o_ref[...] = (yn * g_ref[...] + beta_ref[...]).astype(o_ref.dtype)


# ------------------------------ JAX wrappers ---------------------------------

def pallas_fused_linears(xs, ws, bs, scales=None, out_dtype=None):
    """y_i = (x_i @ W_i + b_i) * scale_i for all i in ONE pallas_call."""
    n = len(xs)
    if scales is None:
        scales = (1.0,) * n
    M, K = xs[0].shape
    eouts = [w.shape[1] for w in ws]
    out_dtype = out_dtype or xs[0].dtype
    budget = _vmem_budget_bytes()
    tm, tk = _choose_linear_tiles(
        M, K, eouts, jnp.dtype(xs[0].dtype).itemsize,
        jnp.dtype(ws[0].dtype).itemsize, jnp.dtype(out_dtype).itemsize, budget)
    gm = pl.cdiv(M, tm)
    gk = K // tk

    in_specs = []
    operands = []
    for x, w, b, eo in zip(xs, ws, bs, eouts):
        in_specs += [
            pl.BlockSpec((tm, tk), lambda m, k: (m, k)),
            pl.BlockSpec((tk, eo), lambda m, k: (k, 0)),
            pl.BlockSpec((1, eo), lambda m, k: (0, 0)),
        ]
        operands += [x, w, b.reshape(1, eo)]

    out_shape = tuple(jax.ShapeDtypeStruct((M, eo), out_dtype) for eo in eouts)
    out_specs = tuple(pl.BlockSpec((tm, eo), lambda m, k: (m, 0)) for eo in eouts)
    scratch = [pltpu.VMEM((tm, eo), jnp.float32) for eo in eouts]

    flops = int(sum(2 * M * K * eo for eo in eouts))
    bytes_accessed = int(
        sum(x.size * x.dtype.itemsize for x in xs)
        + sum(w.size * w.dtype.itemsize for w in ws)
        + sum(b.size * b.dtype.itemsize for b in bs)
        + sum(M * eo * jnp.dtype(out_dtype).itemsize for eo in eouts))

    result = pl.pallas_call(
        functools.partial(_multi_linear_kernel, n=n, scales=tuple(scales)),
        out_shape=out_shape,
        grid=(gm, gk),
        in_specs=in_specs,
        out_specs=out_specs,
        scratch_shapes=scratch,
        compiler_params=pltpu.CompilerParams(
            dimension_semantics=("parallel", "arbitrary"),
            vmem_limit_bytes=budget),
        cost_estimate=pl.CostEstimate(flops=flops, transcendentals=0,
                                      bytes_accessed=bytes_accessed),
    )(*operands)
    return list(result)


def pallas_attention(q, k, v, num_heads):
    """q: (N, Lq, E), k/v: (N, Lk, E) -> (N, Lq, E). Flash-style, heads in-kernel."""
    N, Lq, E = q.shape
    Lk = k.shape[1]
    D = E // num_heads
    budget = _vmem_budget_bytes()
    itemsize = q.dtype.itemsize
    tq, tkv = _choose_attn_tiles(Lq, Lk, E, num_heads, itemsize, budget)
    gq = pl.cdiv(Lq, tq)
    gk = Lk // tkv              # tkv always divides Lk (softmax correctness)

    flops = int(N * num_heads * 4 * Lq * Lk * D)
    bytes_accessed = int((q.size + k.size + v.size + N * Lq * E) * itemsize)

    return pl.pallas_call(
        functools.partial(_flash_attention_kernel, num_heads=num_heads),
        out_shape=jax.ShapeDtypeStruct((N, Lq, E), q.dtype),
        grid=(N, gq, gk),
        in_specs=[pl.BlockSpec((1, tq, E), lambda n, qi, ki: (n, qi, 0)),
                  pl.BlockSpec((1, tkv, E), lambda n, qi, ki: (n, ki, 0)),
                  pl.BlockSpec((1, tkv, E), lambda n, qi, ki: (n, ki, 0))],
        out_specs=pl.BlockSpec((1, tq, E), lambda n, qi, ki: (n, qi, 0)),
        scratch_shapes=[pltpu.VMEM((num_heads, tq, 1), jnp.float32),  # m
                        pltpu.VMEM((num_heads, tq, 1), jnp.float32),  # l
                        pltpu.VMEM((tq, E), jnp.float32)],            # acc
        compiler_params=pltpu.CompilerParams(
            dimension_semantics=("parallel", "parallel", "arbitrary"),
            vmem_limit_bytes=budget),
        cost_estimate=pl.CostEstimate(
            flops=flops, transcendentals=int(N * num_heads * Lq * Lk),
            bytes_accessed=bytes_accessed),
    )(q, k, v)


def pallas_out_proj_layernorm(x, w, b, residual, gamma, beta, eps=1e-5,
                              out_dtype=None):
    """LayerNorm(x @ W + b + residual) * gamma + beta, row-tiled over M."""
    M, K = x.shape
    E = w.shape[1]
    out_dtype = out_dtype or residual.dtype
    budget = _vmem_budget_bytes()
    tm, tk = _choose_linear_tiles(
        M, K, [E], x.dtype.itemsize, w.dtype.itemsize,
        jnp.dtype(out_dtype).itemsize, budget,
        extra_row_bytes=E * residual.dtype.itemsize)
    gm = pl.cdiv(M, tm)
    gk = K // tk
    flops = int(2 * M * K * E + 10 * M * E)
    bytes_accessed = int(x.size * x.dtype.itemsize + K * E * w.dtype.itemsize
                         + residual.size * residual.dtype.itemsize
                         + M * E * jnp.dtype(out_dtype).itemsize + 3 * E * 4)
    return pl.pallas_call(
        functools.partial(_out_proj_ln_kernel, eps=eps),
        out_shape=jax.ShapeDtypeStruct((M, E), out_dtype),
        grid=(gm, gk),
        in_specs=[pl.BlockSpec((tm, tk), lambda m, k: (m, k)),   # x
                  pl.BlockSpec((tk, E), lambda m, k: (k, 0)),    # W
                  pl.BlockSpec((1, E), lambda m, k: (0, 0)),     # b
                  pl.BlockSpec((tm, E), lambda m, k: (m, 0)),    # residual
                  pl.BlockSpec((1, E), lambda m, k: (0, 0)),     # gamma
                  pl.BlockSpec((1, E), lambda m, k: (0, 0))],    # beta
        out_specs=pl.BlockSpec((tm, E), lambda m, k: (m, 0)),
        scratch_shapes=[pltpu.VMEM((tm, E), jnp.float32)],
        compiler_params=pltpu.CompilerParams(
            dimension_semantics=("parallel", "arbitrary"),
            vmem_limit_bytes=budget),
        cost_estimate=pl.CostEstimate(flops=flops, transcendentals=2 * M,
                                      bytes_accessed=bytes_accessed),
    )(x, w, b.reshape(1, E), residual, gamma.reshape(1, E), beta.reshape(1, E))


def init_params(key, embed_size):
    """Deterministic parameter init (Linear weights stored as (in, out))."""
    keys = jax.random.split(key, 8)
    bound = 1.0 / float(embed_size) ** 0.5

    def lin(kw, kb):
        w = jax.random.uniform(kw, (embed_size, embed_size), jnp.float32, -bound, bound)
        b = jax.random.uniform(kb, (embed_size,), jnp.float32, -bound, bound)
        return w, b

    q_w, q_b = lin(keys[0], keys[1])
    k_w, k_b = lin(keys[2], keys[3])
    v_w, v_b = lin(keys[4], keys[5])
    o_w, o_b = lin(keys[6], keys[7])
    ln_g = jnp.ones((embed_size,), jnp.float32)
    ln_b = jnp.zeros((embed_size,), jnp.float32)
    return dict(q_w=q_w, q_b=q_b, k_w=k_w, k_b=k_b, v_w=v_w, v_b=v_b,
                o_w=o_w, o_b=o_b, ln_g=ln_g, ln_b=ln_b)


def multi_head_attention(params, values, keys, query, num_heads,
                         interm_dtype=None):
    """Mirrors MultiHeadAttentionLayer.forward (mask=None, eval-mode dropout).

    interm_dtype: storage dtype for the Q/K/V/attention-output kernel hand-offs
    (bf16 in production halves HBM traffic; in-kernel math stays f32).
    """
    N, Lq, E = query.shape
    Lk = keys.shape[1]
    assert E % num_heads == 0, "embed_size must be divisible by num_heads"
    D = E // num_heads
    scale = 1.0 / float(D) ** 0.5          # folded into the Q projection
    interm_dtype = interm_dtype or query.dtype

    q2 = query.reshape(N * Lq, E)
    k2 = keys.reshape(N * Lk, E)
    v2 = values.reshape(N * Lk, E)

    if Lq == Lk:
        # Fused Q/K/V projections: one kernel launch, shared grid & pipeline.
        Q, K, V = pallas_fused_linears(
            [q2, k2, v2],
            [params["q_w"], params["k_w"], params["v_w"]],
            [params["q_b"], params["k_b"], params["v_b"]],
            scales=[scale, 1.0, 1.0], out_dtype=interm_dtype)
    else:
        (Q,) = pallas_fused_linears([q2], [params["q_w"]], [params["q_b"]],
                                    scales=[scale], out_dtype=interm_dtype)
        (K,) = pallas_fused_linears([k2], [params["k_w"]], [params["k_b"]],
                                    out_dtype=interm_dtype)
        (V,) = pallas_fused_linears([v2], [params["v_w"]], [params["v_b"]],
                                    out_dtype=interm_dtype)

    # No host-side head transposes: heads are split/merged inside the kernel.
    Oh = pallas_attention(Q.reshape(N, Lq, E), K.reshape(N, Lk, E),
                          V.reshape(N, Lk, E), num_heads)        # (N, Lq, E)

    # fc_out + residual + layernorm fused; dropout is identity (eval mode).
    out = pallas_out_proj_layernorm(Oh.reshape(N * Lq, E),
                                    params["o_w"], params["o_b"],
                                    q2, params["ln_g"], params["ln_b"],
                                    out_dtype=query.dtype)
    return out.reshape(N, Lq, E)


# ------------------------------- reference -----------------------------------

def reference_mha(params, values, keys, query, num_heads):
    N, Lq, E = query.shape
    Lk = keys.shape[1]
    H = num_heads
    D = E // H
    Q = query @ params["q_w"] + params["q_b"]
    K = keys @ params["k_w"] + params["k_b"]
    V = values @ params["v_w"] + params["v_b"]
    Q = Q.reshape(N, Lq, H, D)
    K = K.reshape(N, Lk, H, D)
    V = V.reshape(N, Lk, H, D)
    s = jnp.einsum("nqhd,nkhd->nhqk", Q, K) / float(D) ** 0.5
    a = jax.nn.softmax(s, axis=-1)
    o = jnp.einsum("nhql,nlhd->nqhd", a, V).reshape(N, Lq, E)
    o = o @ params["o_w"] + params["o_b"]
    y = o + query
    mean = jnp.mean(y, axis=-1, keepdims=True)
    var = jnp.mean((y - mean) ** 2, axis=-1, keepdims=True)
    yn = (y - mean) * jax.lax.rsqrt(var + 1e-5)
    return yn * params["ln_g"] + params["ln_b"]


if __name__ == "__main__":
    N, L, E, H = 2, 8, 32, 4
    key = jax.random.PRNGKey(0)
    k_p, k_v, k_k, k_q = jax.random.split(key, 4)
    params = init_params(k_p, E)
    values = jax.random.normal(k_v, (N, L, E), jnp.float32)
    keys_in = jax.random.normal(k_k, (N, L, E), jnp.float32)
    query = jax.random.normal(k_q, (N, L, E), jnp.float32)

    ref = reference_mha(params, values, keys_in, query, H)

    # f32 intermediates: tight check.
    out = multi_head_attention(params, values, keys_in, query, H)
    out = jax.block_until_ready(out)
    assert out.shape == (N, L, E)
    assert jnp.allclose(out, ref, atol=2e-3, rtol=2e-3), "mismatch vs JAX reference"

    # bf16 intermediates (production HBM-traffic config): storage-rounding tolerance.
    out_bf16 = multi_head_attention(params, values, keys_in, query, H,
                                    interm_dtype=jnp.bfloat16)
    out_bf16 = jax.block_until_ready(out_bf16)
    assert jnp.allclose(out_bf16, ref, atol=5e-2, rtol=5e-2), "bf16 path mismatch"

    print("KERNEL_OK")
</pallas_src>

<mosaic_0001>
module attributes {stable_mosaic.version = 11 : i64} {
  func.func @_multi_linear_kernel(%arg0: i32, %arg1: i32, %arg2: memref<16x32xf32, #tpu.memory_space<vmem>>, %arg3: memref<32x32xf32, #tpu.memory_space<vmem>>, %arg4: memref<1x32xf32, #tpu.memory_space<vmem>>, %arg5: memref<16x32xf32, #tpu.memory_space<vmem>>, %arg6: memref<32x32xf32, #tpu.memory_space<vmem>>, %arg7: memref<1x32xf32, #tpu.memory_space<vmem>>, %arg8: memref<16x32xf32, #tpu.memory_space<vmem>>, %arg9: memref<32x32xf32, #tpu.memory_space<vmem>>, %arg10: memref<1x32xf32, #tpu.memory_space<vmem>>, %arg11: memref<16x32xf32, #tpu.memory_space<vmem>>, %arg12: memref<16x32xf32, #tpu.memory_space<vmem>>, %arg13: memref<16x32xf32, #tpu.memory_space<vmem>>, %arg14: memref<16x32xf32, #tpu.memory_space<vmem>>, %arg15: memref<16x32xf32, #tpu.memory_space<vmem>>, %arg16: memref<16x32xf32, #tpu.memory_space<vmem>>) attributes {dimension_semantics = [#tpu.dimension_semantics<parallel>, #tpu.dimension_semantics<arbitrary>], iteration_bounds = array<i64: 1, 1>, scalar_prefetch = 0 : i64, scratch_operands = 3 : i64, tpu.core_type = #tpu.core_type<tc>, window_params = [{transform_indices = @transform_0, window_bounds = array<i64: 16, 32>}, {transform_indices = @transform_1, window_bounds = array<i64: 32, 32>}, {pipeline_mode = #tpu.pipeline_mode<synchronous>, transform_indices = @transform_2, window_bounds = array<i64: 1, 32>}, {transform_indices = @transform_3, window_bounds = array<i64: 16, 32>}, {transform_indices = @transform_4, window_bounds = array<i64: 32, 32>}, {pipeline_mode = #tpu.pipeline_mode<synchronous>, transform_indices = @transform_5, window_bounds = array<i64: 1, 32>}, {transform_indices = @transform_6, window_bounds = array<i64: 16, 32>}, {transform_indices = @transform_7, window_bounds = array<i64: 32, 32>}, {pipeline_mode = #tpu.pipeline_mode<synchronous>, transform_indices = @transform_8, window_bounds = array<i64: 1, 32>}, {transform_indices = @transform_9, window_bounds = array<i64: 16, 32>}, {transform_indices = @transform_10, window_bounds = array<i64: 16, 32>}, {transform_indices = @transform_11, window_bounds = array<i64: 16, 32>}]} {
    %c0_i32 = arith.constant 0 : i32
    %0 = arith.cmpi eq, %arg1, %c0_i32 : i32
    %1 = arith.extui %0 : i1 to i32
    %c0_i32_0 = arith.constant 0 : i32
    %2 = arith.cmpi ne, %1, %c0_i32_0 : i32
    scf.if %2 {
      %c0_36 = arith.constant 0 : index
      %c0_37 = arith.constant 0 : index
      %36 = vector.load %arg4[%c0_36, %c0_37] : memref<1x32xf32, #tpu.memory_space<vmem>>, vector<1x32xf32>
      %37 = vector.shape_cast %36 : vector<1x32xf32> to vector<1x32xf32>
      %38 = vector.broadcast %37 : vector<1x32xf32> to vector<16x32xf32>
      %c0_38 = arith.constant 0 : index
      %c0_39 = arith.constant 0 : index
      %39 = vector.load %arg14[%c0_38, %c0_39] : memref<16x32xf32, #tpu.memory_space<vmem>>, vector<16x32xf32>
      tpu.vector_store %arg14[%c0_38, %c0_39], %38 {strides = array<i32>} : memref<16x32xf32, #tpu.memory_space<vmem>>, vector<16x32xf32>,
    } else {
    }
    %c0 = arith.constant 0 : index
    %c0_1 = arith.constant 0 : index
    %3 = vector.load %arg14[%c0, %c0_1] : memref<16x32xf32, #tpu.memory_space<vmem>>, vector<16x32xf32>
    %c0_2 = arith.constant 0 : index
    %c0_3 = arith.constant 0 : index
    %4 = vector.load %arg2[%c0_2, %c0_3] : memref<16x32xf32, #tpu.memory_space<vmem>>, vector<16x32xf32>
    %c0_4 = arith.constant 0 : index
    %c0_5 = arith.constant 0 : index
    %5 = vector.load %arg3[%c0_4, %c0_5] : memref<32x32xf32, #tpu.memory_space<vmem>>, vector<32x32xf32>
    %cst = arith.constant dense<0.000000e+00> : vector<16x32xf32>
    %6 = tpu.matmul %4, %5, %cst {dimension_numbers = #tpu.dot_dimension_numbers<[1], [0], [0], [1], [0, 0, 1, 1], [], []>} : vector<16x32xf32>, vector<32x32xf32>, vector<16x32xf32> -> vector<16x32xf32>
    %7 = arith.addf %3, %6 : vector<16x32xf32>
    %c0_6 = arith.constant 0 : index
    %c0_7 = arith.constant 0 : index
    %8 = vector.load %arg14[%c0_6, %c0_7] : memref<16x32xf32, #tpu.memory_space<vmem>>, vector<16x32xf32>
    tpu.vector_store %arg14[%c0_6, %c0_7], %7 {strides = array<i32>} : memref<16x32xf32, #tpu.memory_space<vmem>>, vector<16x32xf32>,
    %c0_i32_8 = arith.constant 0 : i32
    %9 = arith.cmpi eq, %arg1, %c0_i32_8 : i32
    %10 = arith.extui %9 : i1 to i32
    %c0_i32_9 = arith.constant 0 : i32
    %11 = arith.cmpi ne, %10, %c0_i32_9 : i32
    scf.if %11 {
      %c0_36 = arith.constant 0 : index
      %c0_37 = arith.constant 0 : index
      %36 = vector.load %arg14[%c0_36, %c0_37] : memref<16x32xf32, #tpu.memory_space<vmem>>, vector<16x32xf32>
      %cst_38 = arith.constant 0.353553385 : f32
      %37 = vector.broadcast %cst_38 : f32 to vector<16x32xf32>
      %38 = arith.mulf %36, %37 : vector<16x32xf32>
      %c0_39 = arith.constant 0 : index
      %c0_40 = arith.constant 0 : index
      %39 = vector.load %arg11[%c0_39, %c0_40] : memref<16x32xf32, #tpu.memory_space<vmem>>, vector<16x32xf32>
      tpu.vector_store %arg11[%c0_39, %c0_40], %38 {strides = array<i32>} : memref<16x32xf32, #tpu.memory_space<vmem>>, vector<16x32xf32>,
    } else {
    }
    %c0_i32_10 = arith.constant 0 : i32
    %12 = arith.cmpi eq, %arg1, %c0_i32_10 : i32
    %13 = arith.extui %12 : i1 to i32
    %c0_i32_11 = arith.constant 0 : i32
    %14 = arith.cmpi ne, %13, %c0_i32_11 : i32
    scf.if %14 {
      %c0_36 = arith.constant 0 : index
      %c0_37 = arith.constant 0 : index
      %36 = vector.load %arg7[%c0_36, %c0_37] : memref<1x32xf32, #tpu.memory_space<vmem>>, vector<1x32xf32>
      %37 = vector.shape_cast %36 : vector<1x32xf32> to vector<1x32xf32>
      %38 = vector.broadcast %37 : vector<1x32xf32> to vector<16x32xf32>
      %c0_38 = arith.constant 0 : index
      %c0_39 = arith.constant 0 : index
      %39 = vector.load %arg15[%c0_38, %c0_39] : memref<16x32xf32, #tpu.memory_space<vmem>>, vector<16x32xf32>
      tpu.vector_store %arg15[%c0_38, %c0_39], %38 {strides = array<i32>} : memref<16x32xf32, #tpu.memory_space<vmem>>, vector<16x32xf32>,
    } else {
    }
    %c0_12 = arith.constant 0 : index
    %c0_13 = arith.constant 0 : index
    %15 = vector.load %arg15[%c0_12, %c0_13] : memref<16x32xf32, #tpu.memory_space<vmem>>, vector<16x32xf32>
    %c0_14 = arith.constant 0 : index
    %c0_15 = arith.constant 0 : index
    %16 = vector.load %arg5[%c0_14, %c0_15] : memref<16x32xf32, #tpu.memory_space<vmem>>, vector<16x32xf32>
    %c0_16 = arith.constant 0 : index
    %c0_17 = arith.constant 0 : index
    %17 = vector.load %arg6[%c0_16, %c0_17] : memref<32x32xf32, #tpu.memory_space<vmem>>, vector<32x32xf32>
    %cst_18 = arith.constant dense<0.000000e+00> : vector<16x32xf32>
    %18 = tpu.matmul %16, %17, %cst_18 {dimension_numbers = #tpu.dot_dimension_numbers<[1], [0], [0], [1], [0, 0, 1, 1], [], []>} : vector<16x32xf32>, vector<32x32xf32>, vector<16x32xf32> -> vector<16x32xf32>
    %19 = arith.addf %15, %18 : vector<16x32xf32>
    %c0_19 = arith.constant 0 : index
    %c0_20 = arith.constant 0 : index
    %20 = vector.load %arg15[%c0_19, %c0_20] : memref<16x32xf32, #tpu.memory_space<vmem>>, vector<16x32xf32>
    tpu.vector_store %arg15[%c0_19, %c0_20], %19 {strides = array<i32>} : memref<16x32xf32, #tpu.memory_space<vmem>>, vector<16x32xf32>,
    %c0_i32_21 = arith.constant 0 : i32
    %21 = arith.cmpi eq, %arg1, %c0_i32_21 : i32
    %22 = arith.extui %21 : i1 to i32
    %c0_i32_22 = arith.constant 0 : i32
    %23 = arith.cmpi ne, %22, %c0_i32_22 : i32
    scf.if %23 {
      %c0_36 = arith.constant 0 : index
      %c0_37 = arith.constant 0 : index
      %36 = vector.load %arg15[%c0_36, %c0_37] : memref<16x32xf32, #tpu.memory_space<vmem>>, vector<16x32xf32>
      %c0_38 = arith.constant 0 : index
      %c0_39 = arith.constant 0 : index
      %37 = vector.load %arg12[%c0_38, %c0_39] : memref<16x32xf32, #tpu.memory_space<vmem>>, vector<16x32xf32>
      tpu.vector_store %arg12[%c0_38, %c0_39], %36 {strides = array<i32>} : memref<16x32xf32, #tpu.memory_space<vmem>>, vector<16x32xf32>,
    } else {
    }
    %c0_i32_23 = arith.constant 0 : i32
    %24 = arith.cmpi eq, %arg1, %c0_i32_23 : i32
    %25 = arith.extui %24 : i1 to i32
    %c0_i32_24 = arith.constant 0 : i32
    %26 = arith.cmpi ne, %25, %c0_i32_24 : i32
    scf.if %26 {
      %c0_36 = arith.constant 0 : index
      %c0_37 = arith.constant 0 : index
      %36 = vector.load %arg10[%c0_36, %c0_37] : memref<1x32xf32, #tpu.memory_space<vmem>>, vector<1x32xf32>
      %37 = vector.shape_cast %36 : vector<1x32xf32> to vector<1x32xf32>
      %38 = vector.broadcast %37 : vector<1x32xf32> to vector<16x32xf32>
      %c0_38 = arith.constant 0 : index
      %c0_39 = arith.constant 0 : index
      %39 = vector.load %arg16[%c0_38, %c0_39] : memref<16x32xf32, #tpu.memory_space<vmem>>, vector<16x32xf32>
      tpu.vector_store %arg16[%c0_38, %c0_39], %38 {strides = array<i32>} : memref<16x32xf32, #tpu.memory_space<vmem>>, vector<16x32xf32>,
    } else {
    }
    %c0_25 = arith.constant 0 : index
    %c0_26 = arith.constant 0 : index
    %27 = vector.load %arg16[%c0_25, %c0_26] : memref<16x32xf32, #tpu.memory_space<vmem>>, vector<16x32xf32>
    %c0_27 = arith.constant 0 : index
    %c0_28 = arith.constant 0 : index
    %28 = vector.load %arg8[%c0_27, %c0_28] : memref<16x32xf32, #tpu.memory_space<vmem>>, vector<16x32xf32>
    %c0_29 = arith.constant 0 : index
    %c0_30 = arith.constant 0 : index
    %29 = vector.load %arg9[%c0_29, %c0_30] : memref<32x32xf32, #tpu.memory_space<vmem>>, vector<32x32xf32>
    %cst_31 = arith.constant dense<0.000000e+00> : vector<16x32xf32>
    %30 = tpu.matmul %28, %29, %cst_31 {dimension_numbers = #tpu.dot_dimension_numbers<[1], [0], [0], [1], [0, 0, 1, 1], [], []>} : vector<16x32xf32>, vector<32x32xf32>, vector<16x32xf32> -> vector<16x32xf32>
    %31 = arith.addf %27, %30 : vector<16x32xf32>
    %c0_32 = arith.constant 0 : index
    %c0_33 = arith.constant 0 : index
    %32 = vector.load %arg16[%c0_32, %c0_33] : memref<16x32xf32, #tpu.memory_space<vmem>>, vector<16x32xf32>
    tpu.vector_store %arg16[%c0_32, %c0_33], %31 {strides = array<i32>} : memref<16x32xf32, #tpu.memory_space<vmem>>, vector<16x32xf32>,
    %c0_i32_34 = arith.constant 0 : i32
    %33 = arith.cmpi eq, %arg1, %c0_i32_34 : i32
    %34 = arith.extui %33 : i1 to i32
    %c0_i32_35 = arith.constant 0 : i32
    %35 = arith.cmpi ne, %34, %c0_i32_35 : i32
    scf.if %35 {
      %c0_36 = arith.constant 0 : index
      %c0_37 = arith.constant 0 : index
      %36 = vector.load %arg16[%c0_36, %c0_37] : memref<16x32xf32, #tpu.memory_space<vmem>>, vector<16x32xf32>
      %c0_38 = arith.constant 0 : index
      %c0_39 = arith.constant 0 : index
      %37 = vector.load %arg13[%c0_38, %c0_39] : memref<16x32xf32, #tpu.memory_space<vmem>>, vector<16x32xf32>
      tpu.vector_store %arg13[%c0_38, %c0_39], %36 {strides = array<i32>} : memref<16x32xf32, #tpu.memory_space<vmem>>, vector<16x32xf32>,
    } else {
    }
    return
  }
  func.func @transform_0(%arg0: i32, %arg1: i32) -> (i32, i32) {
    %c0_i32 = arith.constant 0 : i32
    return %arg0, %arg1 : i32, i32
  }
  func.func @transform_1(%arg0: i32, %arg1: i32) -> (i32, i32) {
    %c0_i32 = arith.constant 0 : i32
    %c0_i32_0 = arith.constant 0 : i32
    return %arg1, %c0_i32 : i32, i32
  }
  func.func @transform_2(%arg0: i32, %arg1: i32) -> (i32, i32) {
    %c0_i32 = arith.constant 0 : i32
    %c0_i32_0 = arith.constant 0 : i32
    %c0_i32_1 = arith.constant 0 : i32
    return %c0_i32, %c0_i32_0 : i32, i32
  }
  func.func @transform_3(%arg0: i32, %arg1: i32) -> (i32, i32) {
    %c0_i32 = arith.constant 0 : i32
    return %arg0, %arg1 : i32, i32
  }
  func.func @transform_4(%arg0: i32, %arg1: i32) -> (i32, i32) {
    %c0_i32 = arith.constant 0 : i32
    %c0_i32_0 = arith.constant 0 : i32
    return %arg1, %c0_i32 : i32, i32
  }
  func.func @transform_5(%arg0: i32, %arg1: i32) -> (i32, i32) {
    %c0_i32 = arith.constant 0 : i32
    %c0_i32_0 = arith.constant 0 : i32
    %c0_i32_1 = arith.constant 0 : i32
    return %c0_i32, %c0_i32_0 : i32, i32
  }
  func.func @transform_6(%arg0: i32, %arg1: i32) -> (i32, i32) {
    %c0_i32 = arith.constant 0 : i32
    return %arg0, %arg1 : i32, i32
  }
  func.func @transform_7(%arg0: i32, %arg1: i32) -> (i32, i32) {
    %c0_i32 = arith.constant 0 : i32
    %c0_i32_0 = arith.constant 0 : i32
    return %arg1, %c0_i32 : i32, i32
  }
  func.func @transform_8(%arg0: i32, %arg1: i32) -> (i32, i32) {
    %c0_i32 = arith.constant 0 : i32
    %c0_i32_0 = arith.constant 0 : i32
    %c0_i32_1 = arith.constant 0 : i32
    return %c0_i32, %c0_i32_0 : i32, i32
  }
  func.func @transform_9(%arg0: i32, %arg1: i32) -> (i32, i32) {
    %c0_i32 = arith.constant 0 : i32
    %c0_i32_0 = arith.constant 0 : i32
    return %arg0, %c0_i32 : i32, i32
  }
  func.func @transform_10(%arg0: i32, %arg1: i32) -> (i32, i32) {
    %c0_i32 = arith.constant 0 : i32
    %c0_i32_0 = arith.constant 0 : i32
    return %arg0, %c0_i32 : i32, i32
  }
  func.func @transform_11(%arg0: i32, %arg1: i32) -> (i32, i32) {
    %c0_i32 = arith.constant 0 : i32
    %c0_i32_0 = arith.constant 0 : i32
    return %arg0, %c0_i32 : i32, i32
  }
}

</mosaic_0001>

<llo_original>
// kernel: tpu_custom_call.1
$region0: #{tpu_custom_call.1}
  #allocation0 [shape = 'u32[]', space=smem, size = 0x4, offset = 0x4, fixed_abs, tag = 'smem constant byte address 0x4 - core index']
  #allocation1 [shape = 'u32[144,128]{1,0:T(1,128)}', space=vmem, size = 0x12000, scoped, tag = 'internal scratch']
  #allocation2 [shape = 'f32[16,32]{1,0:T(8,128)}', space=vmem, size = 0x2000, scoped, tag = 'scratch operand']
  #allocation3 [shape = 'f32[16,32]{1,0:T(8,128)}', space=vmem, size = 0x2000, scoped, tag = 'scratch operand']
  #allocation4 [shape = 'f32[16,32]{1,0:T(8,128)}', space=vmem, size = 0x2000, scoped, tag = 'scratch operand']
  %s0 = inlined_call_operand.hbm [shape: f32[16,32], index: 0, kind: input, shape index: {}]
  %s1 = inlined_call_operand.hbm [shape: f32[32,32], index: 1, kind: input, shape index: {}]
  %s2 = inlined_call_operand.vmem [shape: f32[1,32], index: 2, kind: input, shape index: {}]
  %s3 = inlined_call_operand.hbm [shape: f32[16,32], index: 3, kind: input, shape index: {}]
  %s4 = inlined_call_operand.hbm [shape: f32[32,32], index: 4, kind: input, shape index: {}]
  %s5 = inlined_call_operand.vmem [shape: f32[1,32], index: 5, kind: input, shape index: {}]
  %s6 = inlined_call_operand.vmem [shape: f32[16,32], index: 6, kind: input, shape index: {}]
  %s7 = inlined_call_operand.hbm [shape: f32[32,32], index: 7, kind: input, shape index: {}]
  %s8 = inlined_call_operand.vmem [shape: f32[1,32], index: 8, kind: input, shape index: {}]
  %s9 = inlined_call_operand.hbm [shape: f32[16,32], index: 9, kind: output, shape index: {0}]
  %s10 = inlined_call_operand.hbm [shape: f32[16,32], index: 10, kind: output, shape index: {1}]
  %s11 = inlined_call_operand.hbm [shape: f32[16,32], index: 11, kind: output, shape index: {2}]
  %12 = xla_tuple %s9, %s10, %s11
  %s13 = sld [smem:[#allocation0]]
  $region98: #{tpu_custom_call.1} parent=0
    _
  %s15 = ssub.s32 1, %s13
  %s16 = scalar_select 0, %s15, %s13
  $region1: #{tpu_custom_call.1} parent=0
    #allocation5 [shape = 'u8[8192]{0}', space=vmem, size = 0x2000, scoped, tag = 'input window, operand 0, single buffered']
    #allocation6 [shape = 's32[1]{0}', space=sflag, size = 0x4, scoped, tag = 'scoped memory for tpu_custom_call.1']
    #allocation7 [shape = 's32[1]{0}', space=sflag, size = 0x4, scoped, tag = 'scoped memory for tpu_custom_call.1']
    #allocation8 [shape = 'u8[16384]{0}', space=vmem, size = 0x4000, scoped, tag = 'input window, operand 1, single buffered']
    #allocation9 [shape = 's32[1]{0}', space=sflag, size = 0x4, scoped, tag = 'scoped memory for tpu_custom_call.1']
    #allocation10 [shape = 'u8[8192]{0}', space=vmem, size = 0x2000, scoped, tag = 'input window, operand 3, single buffered']
    #allocation11 [shape = 'u8[16384]{0}', space=vmem, size = 0x4000, scoped, tag = 'input window, operand 4, single buffered']
    #allocation12 [shape = 's32[1]{0}', space=sflag, size = 0x4, scoped, tag = 'scoped memory for tpu_custom_call.1']
    #allocation13 [shape = 'u8[16384]{0}', space=vmem, size = 0x4000, scoped, tag = 'input window, operand 7, single buffered']
    #allocation14 [shape = 'u8[8192]{0}', space=vmem, size = 0x2000, scoped, tag = 'output window, operand 0, single buffered']
    #allocation15 [shape = 'u8[8192]{0}', space=vmem, size = 0x2000, scoped, tag = 'output window, operand 1, single buffered']
    #allocation16 [shape = 's32[1]{0}', space=sflag, size = 0x4, scoped, tag = 'scoped memory for tpu_custom_call.1']
    #allocation17 [shape = 'u8[8192]{0}', space=vmem, size = 0x2000, scoped, tag = 'output window, operand 2, single buffered']
    %17 = vsyncpa [#allocation6], 0
    %18 = vsyncpa [#allocation9], 0
    %19 = vsyncpa [#allocation12], 0
    %20 = vsyncpa [#allocation7], 0
    %21 = vsyncpa [#allocation16], 0
    // Predicated region
    $region2: #{tpu_custom_call.1} parent=1 // pred_check
      _
    $region3: #{tpu_custom_call.1} parent=1 // pred_check_branch
      %23 = sbr.rel (0) target = $region5
    $region4: #{tpu_custom_call.1} parent=1 // pred_region
      %s25 = ssub.s32 256, 256
      %26 = vsyncadd [#allocation6], %s25
      %s27 = sshll.u32 [#allocation5], 4
      %s28 = int_to_ptr.vmem [resolvable:$true] %s27
      %33 = dma.hbm_to_vmem [thread:$0]  %s0, 256, %s28, [#allocation6], 128, 128, 8
    $region5: #{tpu_custom_call.1} parent=1 // pred_fallthru
      _
    // Predicated region
    $region6: #{tpu_custom_call.1} parent=1 // pred_check
      _
    $region7: #{tpu_custom_call.1} parent=1 // pred_check_branch
      %35 = sbr.rel (0) target = $region9
    $region8: #{tpu_custom_call.1} parent=1 // pred_region
      %s37 = ssub.s32 512, 512
      %38 = vsyncadd [#allocation9], %s37
      %s39 = sshll.u32 [#allocation8], 4
      %s40 = int_to_ptr.vmem [resolvable:$true] %s39
      %45 = dma.hbm_to_vmem [thread:$0]  %s1, 512, %s40, [#allocation9], 128, 128, 8
    $region9: #{tpu_custom_call.1} parent=1 // pred_fallthru
      _
    // Predicated region
    $region10: #{tpu_custom_call.1} parent=1 // pred_check
      _
    $region11: #{tpu_custom_call.1} parent=1 // pred_check_branch
      %47 = sbr.rel (0) target = $region13
    $region12: #{tpu_custom_call.1} parent=1 // pred_region
      _
    $region13: #{tpu_custom_call.1} parent=1 // pred_fallthru
      _
    // Predicated region
    $region14: #{tpu_custom_call.1} parent=1 // pred_check
      _
    $region15: #{tpu_custom_call.1} parent=1 // pred_check_branch
      %49 = sbr.rel (0) target = $region17
    $region16: #{tpu_custom_call.1} parent=1 // pred_region
      %s51 = ssub.s32 256, 256
      %52 = vsyncadd [#allocation9], %s51
      %s53 = sshll.u32 [#allocation10], 4
      %s54 = int_to_ptr.vmem [resolvable:$true] %s53
      %59 = dma.hbm_to_vmem [thread:$0]  %s3, 256, %s54, [#allocation9], 128, 128, 8
    $region17: #{tpu_custom_call.1} parent=1 // pred_fallthru
      _
    // Predicated region
    $region18: #{tpu_custom_call.1} parent=1 // pred_check
      _
    $region19: #{tpu_custom_call.1} parent=1 // pred_check_branch
      %61 = sbr.rel (0) target = $region21
    $region20: #{tpu_custom_call.1} parent=1 // pred_region
      %s63 = ssub.s32 512, 512
      %64 = vsyncadd [#allocation12], %s63
      %s65 = sshll.u32 [#allocation11], 4
      %s66 = int_to_ptr.vmem [resolvable:$true] %s65
      %71 = dma.hbm_to_vmem [thread:$0]  %s4, 512, %s66, [#allocation12], 128, 128, 8
    $region21: #{tpu_custom_call.1} parent=1 // pred_fallthru
      _
    // Predicated region
    $region22: #{tpu_custom_call.1} parent=1 // pred_check
      _
    $region23: #{tpu_custom_call.1} parent=1 // pred_check_branch
      %73 = sbr.rel (0) target = $region25
    $region24: #{tpu_custom_call.1} parent=1 // pred_region
      _
    $region25: #{tpu_custom_call.1} parent=1 // pred_fallthru
      _
    // Predicated region
    $region26: #{tpu_custom_call.1} parent=1 // pred_check
      _
    $region27: #{tpu_custom_call.1} parent=1 // pred_check_branch
      %75 = sbr.rel (0) target = $region29
    $region28: #{tpu_custom_call.1} parent=1 // pred_region
      _
    $region29: #{tpu_custom_call.1} parent=1 // pred_fallthru
      _
    // Predicated region
    $region30: #{tpu_custom_call.1} parent=1 // pred_check
      _
    $region31: #{tpu_custom_call.1} parent=1 // pred_check_branch
      %77 = sbr.rel (0) target = $region33
    $region32: #{tpu_custom_call.1} parent=1 // pred_region
      %s79 = ssub.s32 512, 512
      %80 = vsyncadd [#allocation12], %s79
      %s81 = sshll.u32 [#allocation13], 4
      %s82 = int_to_ptr.vmem [resolvable:$true] %s81
      %87 = dma.hbm_to_vmem [thread:$0]  %s7, 512, %s82, [#allocation12], 128, 128, 8
    $region33: #{tpu_custom_call.1} parent=1 // pred_fallthru
      _
    // Predicated region
    $region34: #{tpu_custom_call.1} parent=1 // pred_check
      _
    $region35: #{tpu_custom_call.1} parent=1 // pred_check_branch
      %89 = sbr.rel (0) target = $region37
    $region36: #{tpu_custom_call.1} parent=1 // pred_region
      _
    $region37: #{tpu_custom_call.1} parent=1 // pred_fallthru
      _
    // Predicated region
    $region38: #{tpu_custom_call.1} parent=1 // pred_check
      _
    $region39: #{tpu_custom_call.1} parent=1 // pred_check_branch
      %91 = sbr.rel (0) target = $region41
    $region40: #{tpu_custom_call.1} parent=1 // pred_region
      %92 = dma.done [#allocation6], 256
    $region41: #{tpu_custom_call.1} parent=1 // pred_fallthru
      _
    // Predicated region
    $region42: #{tpu_custom_call.1} parent=1 // pred_check
      _
    $region43: #{tpu_custom_call.1} parent=1 // pred_check_branch
      %94 = sbr.rel (0) target = $region45
    $region44: #{tpu_custom_call.1} parent=1 // pred_region
      %95 = dma.done [#allocation9], 512
    $region45: #{tpu_custom_call.1} parent=1 // pred_fallthru
      _
    // Predicated region
    $region46: #{tpu_custom_call.1} parent=1 // pred_check
      _
    $region47: #{tpu_custom_call.1} parent=1 // pred_check_branch
      %97 = sbr.rel (0) target = $region49
    $region48: #{tpu_custom_call.1} parent=1 // pred_region
      %98 = dma.done [#allocation9], 256
    $region49: #{tpu_custom_call.1} parent=1 // pred_fallthru
      _
    // Predicated region
    $region50: #{tpu_custom_call.1} parent=1 // pred_check
      _
    $region51: #{tpu_custom_call.1} parent=1 // pred_check_branch
      %100 = sbr.rel (0) target = $region53
    $region52: #{tpu_custom_call.1} parent=1 // pred_region
      %101 = dma.done [#allocation12], 512
    $region53: #{tpu_custom_call.1} parent=1 // pred_fallthru
      _
    // Predicated region
    $region54: #{tpu_custom_call.1} parent=1 // pred_check
      _
    $region55: #{tpu_custom_call.1} parent=1 // pred_check_branch
      %103 = sbr.rel (0) target = $region57
    $region56: #{tpu_custom_call.1} parent=1 // pred_region
      %104 = dma.done [#allocation12], 512
    $region57: #{tpu_custom_call.1} parent=1 // pred_fallthru
      _
    %p105 = scmp.eq.s32.totalorder 0, 0
    // Predicated region
    $region58: #{tpu_custom_call.1} parent=1 // pred_check
      %p106 = pneg %p105
    $region59: #{tpu_custom_call.1} parent=1 // pred_check_branch
      %108 = sbr.rel (%p106) target = $region61
    $region60: #{tpu_custom_call.1} parent=1 // pred_region
      %v109 = vld [vmem:[%s2] sm:$0x1]
      %v111 = vlaneseq
      %v112 = vshrl.u32 %v111, 7
      %v113 = vsub.s32 0, %v112
      %v114 = vrot.slane %v109, %v113
      %vm116 = vcmask 261120
      %117 = vst.msk [vmem:[#allocation2] sm:$0xff] %vm116, %v114
      %118 = vst.msk [vmem:[#allocation2 + $0x8] sm:$0xff] %vm116, %v114
    $region61: #{tpu_custom_call.1} parent=1 // pred_fallthru
      _
    %v119 = vld [vmem:[#allocation2] sm:$0xff]
    %v120 = vld [vmem:[#allocation2 + $0x8] sm:$0xff]
    %v121 = vld [vmem:[#allocation5] sm:$0xff]
    %v122 = vld [vmem:[#allocation5 + $0x8] sm:$0xff]
    %v123 = vld [vmem:[#allocation8] sm:$0xff]
    %v124 = vld [vmem:[#allocation8 + $0x8] sm:$0xff]
    %v125 = vld [vmem:[#allocation8 + $0x10] sm:$0xff]
    %v126 = vld [vmem:[#allocation8 + $0x18] sm:$0xff]
    %vm127 = vcmask 261120
    %v129 = vsel %vm127, %v121, 0
    %v132 = vsel %vm127, %v122, 0
    %134 = vmatprep.subr.mxu0 0.0
    %135 = vmatpush1.msra.mxu0 %v123
    %136 = vmatprep.subr.mxu0 0.0
    %137 = vmatpush1.msra.mxu0 %v124
    %138 = vmatprep.subr.mxu0 0.0
    %139 = vmatpush1.msra.mxu0 %v125
    %140 = vmatprep.subr.mxu0 0.0
    %141 = vmatpush1.msra.mxu0 %v126
    %142 = vmatprep.subr.mxu0 0.0
    %143 = vmatpush1.msra.mxu0 0.0
    %144 = vmatprep.subr.mxu0 0.0
    %145 = vmatpush1.msra.mxu0 0.0
    %146 = vmatprep.subr.mxu0 0.0
    %147 = vmatpush1.msra.mxu0 0.0
    %148 = vmatprep.subr.mxu0 0.0
    %149 = vmatpush1.msra.mxu0 0.0
    %150 = vmatprep.subr.mxu0 0.0
    %151 = vmatpush1.msra.mxu0 0.0
    %152 = vmatprep.subr.mxu0 0.0
    %153 = vmatpush1.msra.mxu0 0.0
    %154 = vmatprep.subr.mxu0 0.0
    %155 = vmatpush1.msra.mxu0 0.0
    %156 = vmatprep.subr.mxu0 0.0
    %157 = vmatpush1.msra.mxu0 0.0
    %158 = vmatprep.subr.mxu0 0.0
    %159 = vmatpush1.msra.mxu0 0.0
    %160 = vmatprep.subr.mxu0 0.0
    %161 = vmatpush1.msra.mxu0 0.0
    %162 = vmatprep.subr.mxu0 0.0
    %163 = vmatpush1.msra.mxu0 0.0
    %164 = vmatprep.subr.mxu0 0.0
    %165 = vmatpush1.msra.mxu0 0.0
    %166 = vmatprep.subr.mxu0 0.0
    %167 = vmatpush1.msra.mxu0 0.0
    %168 = vmatprep.subr.mxu0 0.0
    %169 = vmatpush1.msra.mxu0 0.0
    %170 = vmatprep.subr.mxu0 0.0
    %171 = vmatpush1.msra.mxu0 0.0
    %172 = vmatprep.subr.mxu0 0.0
    %173 = vmatpush1.msra.mxu0 0.0
    %174 = vmatprep.subr.mxu0 0.0
    %175 = vmatpush1.msra.mxu0 0.0
    %176 = vmatprep.subr.mxu0 0.0
    %177 = vmatpush1.msra.mxu0 0.0
    %178 = vmatprep.subr.mxu0 0.0
    %179 = vmatpush1.msra.mxu0 0.0
    %180 = vmatprep.subr.mxu0 0.0
    %181 = vmatpush1.msra.mxu0 0.0
    %182 = vmatprep.subr.mxu0 0.0
    %183 = vmatpush1.msra.mxu0 0.0
    %184 = vmatprep.subr.mxu0 0.0
    %185 = vmatpush1.msra.mxu0 0.0
    %186 = vmatprep.subr.mxu0 0.0
    %187 = vmatpush1.msra.mxu0 0.0
    %188 = vmatprep.subr.mxu0 0.0
    %189 = vmatpush1.msra.mxu0 0.0
    %190 = vmatprep.subr.mxu0 0.0
    %191 = vmatpush1.msra.mxu0 0.0
    %192 = vmatprep.subr.mxu0 0.0
    %193 = vmatpush1.msra.mxu0 0.0
    %194 = vmatprep.subr.mxu0 0.0
    %195 = vmatpush1.msra.mxu0 0.0
    %196 = vmatprep.subr.mxu0 0.0
    %197 = vmatpush1.msra.mxu0 0.0
    %198 = vmatprep.mubr.f32.mxu0 0.0
    %199 = vmatmul.mubr.f32.gmra.mrb[0].mxu0 %v129
    %v200 = vpop.f32.mrb[0].mxu0
    %v201 = vadd.f32 0.0, %v200
    %v202 = vpop.f32.mrb[0].mxu0
    %203 = vmatprep.mubr.f32.mxu0 0.0
    %204 = vmatmul.mubr.f32.gmra.mrb[0].mxu0 %v132
    %v205 = vpop.f32.mrb[0].mxu0
    %v206 = vadd.f32 0.0, %v205
    %v207 = vpop.f32.mrb[0].mxu0
    %208 = vdwg.mxu0
    %v209 = vadd.f32 %v119, %v201
    %v210 = vadd.f32 %v120, %v206
    %211 = vst.msk [vmem:[#allocation2] sm:$0xff] %vm127, %v209
    %212 = vst.msk [vmem:[#allocation2 + $0x8] sm:$0xff] %vm127, %v210
    // Predicated region
    $region62: #{tpu_custom_call.1} parent=1 // pred_check
      %p213 = pneg %p105
    $region63: #{tpu_custom_call.1} parent=1 // pred_check_branch
      %215 = sbr.rel (%p213) target = $region65
    $region64: #{tpu_custom_call.1} parent=1 // pred_region
      %v216 = vld [vmem:[#allocation2] sm:$0xff]
      %v217 = vld [vmem:[#allocation2 + $0x8] sm:$0xff]
      %v218 = vmul.f32 %v216, 0.35355338
      %v219 = vmul.f32 %v217, 0.35355338
      %220 = vst.msk [vmem:[#allocation14] sm:$0xff] %vm127, %v218
      %221 = vst.msk [vmem:[#allocation14 + $0x8] sm:$0xff] %vm127, %v219
      %v222 = vld [vmem:[%s5] sm:$0x1]
      %v224 = vlaneseq
      %v225 = vshrl.u32 %v224, 7
      %v226 = vsub.s32 0, %v225
      %v227 = vrot.slane %v222, %v226
      %229 = vst.msk [vmem:[#allocation3] sm:$0xff] %vm127, %v227
      %230 = vst.msk [vmem:[#allocation3 + $0x8] sm:$0xff] %vm127, %v227
    $region65: #{tpu_custom_call.1} parent=1 // pred_fallthru
      _
    %v231 = vld [vmem:[#allocation3] sm:$0xff]
    %v232 = vld [vmem:[#allocation3 + $0x8] sm:$0xff]
    %v233 = vld [vmem:[#allocation10] sm:$0xff]
    %v234 = vld [vmem:[#allocation10 + $0x8] sm:$0xff]
    %v235 = vld [vmem:[#allocation11] sm:$0xff]
    %v236 = vld [vmem:[#allocation11 + $0x8] sm:$0xff]
    %v237 = vld [vmem:[#allocation11 + $0x10] sm:$0xff]
    %v238 = vld [vmem:[#allocation11 + $0x18] sm:$0xff]
    %v240 = vsel %vm127, %v233, 0
    %v243 = vsel %vm127, %v234, 0
    %245 = vmatprep.subr.mxu0 0.0
    %246 = vmatpush1.msra.mxu0 %v235
    %247 = vmatprep.subr.mxu0 0.0
    %248 = vmatpush1.msra.mxu0 %v236
    %249 = vmatprep.subr.mxu0 0.0
    %250 = vmatpush1.msra.mxu0 %v237
    %251 = vmatprep.subr.mxu0 0.0
    %252 = vmatpush1.msra.mxu0 %v238
    %253 = vmatprep.subr.mxu0 0.0
    %254 = vmatpush1.msra.mxu0 0.0
    %255 = vmatprep.subr.mxu0 0.0
    %256 = vmatpush1.msra.mxu0 0.0
    %257 = vmatprep.subr.mxu0 0.0
    %258 = vmatpush1.msra.mxu0 0.0
    %259 = vmatprep.subr.mxu0 0.0
    %260 = vmatpush1.msra.mxu0 0.0
    %261 = vmatprep.subr.mxu0 0.0
    %262 = vmatpush1.msra.mxu0 0.0
    %263 = vmatprep.subr.mxu0 0.0
    %264 = vmatpush1.msra.mxu0 0.0
    %265 = vmatprep.subr.mxu0 0.0
    %266 = vmatpush1.msra.mxu0 0.0
    %267 = vmatprep.subr.mxu0 0.0
    %268 = vmatpush1.msra.mxu0 0.0
    %269 = vmatprep.subr.mxu0 0.0
    %270 = vmatpush1.msra.mxu0 0.0
    %271 = vmatprep.subr.mxu0 0.0
    %272 = vmatpush1.msra.mxu0 0.0
    %273 = vmatprep.subr.mxu0 0.0
    %274 = vmatpush1.msra.mxu0 0.0
    %275 = vmatprep.subr.mxu0 0.0
    %276 = vmatpush1.msra.mxu0 0.0
    %277 = vmatprep.subr.mxu0 0.0
    %278 = vmatpush1.msra.mxu0 0.0
    %279 = vmatprep.subr.mxu0 0.0
    %280 = vmatpush1.msra.mxu0 0.0
    %281 = vmatprep.subr.mxu0 0.0
    %282 = vmatpush1.msra.mxu0 0.0
    %283 = vmatprep.subr.mxu0 0.0
    %284 = vmatpush1.msra.mxu0 0.0
    %285 = vmatprep.subr.mxu0 0.0
    %286 = vmatpush1.msra.mxu0 0.0
    %287 = vmatprep.subr.mxu0 0.0
    %288 = vmatpush1.msra.mxu0 0.0
    %289 = vmatprep.subr.mxu0 0.0
    %290 = vmatpush1.msra.mxu0 0.0
    %291 = vmatprep.subr.mxu0 0.0
    %292 = vmatpush1.msra.mxu0 0.0
    %293 = vmatprep.subr.mxu0 0.0
    %294 = vmatpush1.msra.mxu0 0.0
    %295 = vmatprep.subr.mxu0 0.0
    %296 = vmatpush1.msra.mxu0 0.0
    %297 = vmatprep.subr.mxu0 0.0
    %298 = vmatpush1.msra.mxu0 0.0
    %299 = vmatprep.subr.mxu0 0.0
    %300 = vmatpush1.msra.mxu0 0.0
    %301 = vmatprep.subr.mxu0 0.0
    %302 = vmatpush1.msra.mxu0 0.0
    %303 = vmatprep.subr.mxu0 0.0
    %304 = vmatpush1.msra.mxu0 0.0
    %305 = vmatprep.subr.mxu0 0.0
    %306 = vmatpush1.msra.mxu0 0.0
    %307 = vmatprep.subr.mxu0 0.0
    %308 = vmatpush1.msra.mxu0 0.0
    %309 = vmatprep.mubr.f32.mxu0 0.0
    %310 = vmatmul.mubr.f32.gmra.mrb[0].mxu0 %v240
    %v311 = vpop.f32.mrb[0].mxu0
    %v312 = vadd.f32 0.0, %v311
    %v313 = vpop.f32.mrb[0].mxu0
    %314 = vmatprep.mubr.f32.mxu0 0.0
    %315 = vmatmul.mubr.f32.gmra.mrb[0].mxu0 %v243
    %v316 = vpop.f32.mrb[0].mxu0
    %v317 = vadd.f32 0.0, %v316
    %v318 = vpop.f32.mrb[0].mxu0
    %319 = vdwg.mxu0
    %v320 = vadd.f32 %v231, %v312
    %v321 = vadd.f32 %v232, %v317
    %322 = vst.msk [vmem:[#allocation3] sm:$0xff] %vm127, %v320
    %323 = vst.msk [vmem:[#allocation3 + $0x8] sm:$0xff] %vm127, %v321
    // Predicated region
    $region66: #{tpu_custom_call.1} parent=1 // pred_check
      %p324 = pneg %p105
    $region67: #{tpu_custom_call.1} parent=1 // pred_check_branch
      %326 = sbr.rel (%p324) target = $region69
    $region68: #{tpu_custom_call.1} parent=1 // pred_region
      %v327 = vld [vmem:[#allocation3] sm:$0xff]
      %v328 = vld [vmem:[#allocation3 + $0x8] sm:$0xff]
      %329 = vst.msk [vmem:[#allocation15] sm:$0xff] %vm127, %v327
      %330 = vst.msk [vmem:[#allocation15 + $0x8] sm:$0xff] %vm127, %v328
      %v331 = vld [vmem:[%s8] sm:$0x1]
      %v333 = vlaneseq
      %v334 = vshrl.u32 %v333, 7
      %v335 = vsub.s32 0, %v334
      %v336 = vrot.slane %v331, %v335
      %338 = vst.msk [vmem:[#allocation4] sm:$0xff] %vm127, %v336
      %339 = vst.msk [vmem:[#allocation4 + $0x8] sm:$0xff] %vm127, %v336
    $region69: #{tpu_custom_call.1} parent=1 // pred_fallthru
      _
    %v340 = vld [vmem:[#allocation4] sm:$0xff]
    %v341 = vld [vmem:[#allocation4 + $0x8] sm:$0xff]
    %v342 = vld [vmem:[%s6] sm:$0xff]
    %v343 = vld [vmem:[%s6 + $0x8] sm:$0xff]
    %v344 = vld [vmem:[#allocation13] sm:$0xff]
    %v345 = vld [vmem:[#allocation13 + $0x8] sm:$0xff]
    %v346 = vld [vmem:[#allocation13 + $0x10] sm:$0xff]
    %v347 = vld [vmem:[#allocation13 + $0x18] sm:$0xff]
    %v349 = vsel %vm127, %v342, 0
    %v352 = vsel %vm127, %v343, 0
    %354 = vmatprep.subr.mxu0 0.0
    %355 = vmatpush1.msra.mxu0 %v344
    %356 = vmatprep.subr.mxu0 0.0
    %357 = vmatpush1.msra.mxu0 %v345
    %358 = vmatprep.subr.mxu0 0.0
    %359 = vmatpush1.msra.mxu0 %v346
    %360 = vmatprep.subr.mxu0 0.0
    %361 = vmatpush1.msra.mxu0 %v347
    %362 = vmatprep.subr.mxu0 0.0
    %363 = vmatpush1.msra.mxu0 0.0
    %364 = vmatprep.subr.mxu0 0.0
    %365 = vmatpush1.msra.mxu0 0.0
    %366 = vmatprep.subr.mxu0 0.0
    %367 = vmatpush1.msra.mxu0 0.0
    %368 = vmatprep.subr.mxu0 0.0
    %369 = vmatpush1.msra.mxu0 0.0
    %370 = vmatprep.subr.mxu0 0.0
    %371 = vmatpush1.msra.mxu0 0.0
    %372 = vmatprep.subr.mxu0 0.0
    %373 = vmatpush1.msra.mxu0 0.0
    %374 = vmatprep.subr.mxu0 0.0
    %375 = vmatpush1.msra.mxu0 0.0
    %376 = vmatprep.subr.mxu0 0.0
    %377 = vmatpush1.msra.mxu0 0.0
    %378 = vmatprep.subr.mxu0 0.0
    %379 = vmatpush1.msra.mxu0 0.0
    %380 = vmatprep.subr.mxu0 0.0
    %381 = vmatpush1.msra.mxu0 0.0
    %382 = vmatprep.subr.mxu0 0.0
    %383 = vmatpush1.msra.mxu0 0.0
    %384 = vmatprep.subr.mxu0 0.0
    %385 = vmatpush1.msra.mxu0 0.0
    %386 = vmatprep.subr.mxu0 0.0
    %387 = vmatpush1.msra.mxu0 0.0
    %388 = vmatprep.subr.mxu0 0.0
    %389 = vmatpush1.msra.mxu0 0.0
    %390 = vmatprep.subr.mxu0 0.0
    %391 = vmatpush1.msra.mxu0 0.0
    %392 = vmatprep.subr.mxu0 0.0
    %393 = vmatpush1.msra.mxu0 0.0
    %394 = vmatprep.subr.mxu0 0.0
    %395 = vmatpush1.msra.mxu0 0.0
    %396 = vmatprep.subr.mxu0 0.0
    %397 = vmatpush1.msra.mxu0 0.0
    %398 = vmatprep.subr.mxu0 0.0
    %399 = vmatpush1.msra.mxu0 0.0
    %400 = vmatprep.subr.mxu0 0.0
    %401 = vmatpush1.msra.mxu0 0.0
    %402 = vmatprep.subr.mxu0 0.0
    %403 = vmatpush1.msra.mxu0 0.0
    %404 = vmatprep.subr.mxu0 0.0
    %405 = vmatpush1.msra.mxu0 0.0
    %406 = vmatprep.subr.mxu0 0.0
    %407 = vmatpush1.msra.mxu0 0.0
    %408 = vmatprep.subr.mxu0 0.0
    %409 = vmatpush1.msra.mxu0 0.0
    %410 = vmatprep.subr.mxu0 0.0
    %411 = vmatpush1.msra.mxu0 0.0
    %412 = vmatprep.subr.mxu0 0.0
    %413 = vmatpush1.msra.mxu0 0.0
    %414 = vmatprep.subr.mxu0 0.0
    %415 = vmatpush1.msra.mxu0 0.0
    %416 = vmatprep.subr.mxu0 0.0
    %417 = vmatpush1.msra.mxu0 0.0
    %418 = vmatprep.mubr.f32.mxu0 0.0
    %419 = vmatmul.mubr.f32.gmra.mrb[0].mxu0 %v349
    %v420 = vpop.f32.mrb[0].mxu0
    %v421 = vadd.f32 0.0, %v420
    %v422 = vpop.f32.mrb[0].mxu0
    %423 = vmatprep.mubr.f32.mxu0 0.0
    %424 = vmatmul.mubr.f32.gmra.mrb[0].mxu0 %v352
    %v425 = vpop.f32.mrb[0].mxu0
    %v426 = vadd.f32 0.0, %v425
    %v427 = vpop.f32.mrb[0].mxu0
    %428 = vdwg.mxu0
    %v429 = vadd.f32 %v340, %v421
    %v430 = vadd.f32 %v341, %v426
    %431 = vst.msk [vmem:[#allocation4] sm:$0xff] %vm127, %v429
    %432 = vst.msk [vmem:[#allocation4 + $0x8] sm:$0xff] %vm127, %v430
    // Predicated region
    $region70: #{tpu_custom_call.1} parent=1 // pred_check
      %p433 = pneg %p105
    $region71: #{tpu_custom_call.1} parent=1 // pred_check_branch
      %435 = sbr.rel (%p433) target = $region73
    $region72: #{tpu_custom_call.1} parent=1 // pred_region
      %v436 = vld [vmem:[#allocation4] sm:$0xff]
      %v437 = vld [vmem:[#allocation4 + $0x8] sm:$0xff]
      %438 = vst.msk [vmem:[#allocation17] sm:$0xff] %vm127, %v436
      %439 = vst.msk [vmem:[#allocation17 + $0x8] sm:$0xff] %vm127, %v437
    $region73: #{tpu_custom_call.1} parent=1 // pred_fallthru
      _
    // Predicated region
    $region74: #{tpu_custom_call.1} parent=1 // pred_check
      _
    $region75: #{tpu_custom_call.1} parent=1 // pred_check_branch
      %441 = sbr.rel (0) target = $region77
    $region76: #{tpu_custom_call.1} parent=1 // pred_region
      %s443 = ssub.s32 256, 256
      %444 = vsyncadd [#allocation7], %s443
      %s445 = sshll.u32 [#allocation14], 4
      %s446 = int_to_ptr.vmem [resolvable:$true] %s445
      %451 = dma.vmem_to_hbm [thread:$0]  %s446, 256, %s9, [#allocation7], 128, 128, 8
    $region77: #{tpu_custom_call.1} parent=1 // pred_fallthru
      _
    // Predicated region
    $region78: #{tpu_custom_call.1} parent=1 // pred_check
      _
    $region79: #{tpu_custom_call.1} parent=1 // pred_check_branch
      %453 = sbr.rel (0) target = $region81
    $region80: #{tpu_custom_call.1} parent=1 // pred_region
      %s455 = ssub.s32 256, 256
      %456 = vsyncadd [#allocation16], %s455
      %s457 = sshll.u32 [#allocation15], 4
      %s458 = int_to_ptr.vmem [resolvable:$true] %s457
      %463 = dma.vmem_to_hbm [thread:$0]  %s458, 256, %s10, [#allocation16], 128, 128, 8
    $region81: #{tpu_custom_call.1} parent=1 // pred_fallthru
      _
    // Predicated region
    $region82: #{tpu_custom_call.1} parent=1 // pred_check
      _
    $region83: #{tpu_custom_call.1} parent=1 // pred_check_branch
      %465 = sbr.rel (0) target = $region85
    $region84: #{tpu_custom_call.1} parent=1 // pred_region
      %s467 = ssub.s32 256, 256
      %468 = vsyncadd [#allocation16], %s467
      %s469 = sshll.u32 [#allocation17], 4
      %s470 = int_to_ptr.vmem [resolvable:$true] %s469
      %475 = dma.vmem_to_hbm [thread:$0]  %s470, 256, %s11, [#allocation16], 128, 128, 8
    $region85: #{tpu_custom_call.1} parent=1 // pred_fallthru
      _
    // Predicated region
    $region86: #{tpu_custom_call.1} parent=1 // pred_check
      _
    $region87: #{tpu_custom_call.1} parent=1 // pred_check_branch
      %477 = sbr.rel (0) target = $region89
    $region88: #{tpu_custom_call.1} parent=1 // pred_region
      %478 = dma.done [#allocation7], 256
    $region89: #{tpu_custom_call.1} parent=1 // pred_fallthru
      _
    // Predicated region
    $region90: #{tpu_custom_call.1} parent=1 // pred_check
      _
    $region91: #{tpu_custom_call.1} parent=1 // pred_check_branch
      %480 = sbr.rel (0) target = $region93
    $region92: #{tpu_custom_call.1} parent=1 // pred_region
      %481 = dma.done [#allocation16], 256
    $region93: #{tpu_custom_call.1} parent=1 // pred_fallthru
      _
    // Predicated region
    $region94: #{tpu_custom_call.1} parent=1 // pred_check
      _
    $region95: #{tpu_custom_call.1} parent=1 // pred_check_branch
      %483 = sbr.rel (0) target = $region97
    $region96: #{tpu_custom_call.1} parent=1 // pred_region
      %484 = dma.done [#allocation16], 256
    $region97: #{tpu_custom_call.1} parent=1 // pred_fallthru
      _
    %485 = vsyncpa [#allocation6], 1
    %486 = vsyncpa [#allocation9], 1
    %487 = vsyncpa [#allocation12], 1
    %488 = vsyncpa [#allocation7], 1
    %489 = vsyncpa [#allocation16], 1

</llo_original>
